<compile_context>
chip_gen: v6e
topology: v6e:2x2x1
jax: 0.10.0
libtpu: 0.0.40
codegen_flags: <defaults>
</compile_context>

<pallas_src>
import jax
import jax.numpy as jnp
from jax.experimental import pallas as pl
from jax.experimental.pallas import tpu as pltpu


def _round_up(x: int, m: int) -> int:
    return (x + m - 1) // m * m


def sum_fusion_kernel(x_ref, y_ref, wx_ref, wy_ref, b_ref, o_ref):
    """One (bm, bn) output tile.  Full-K blocks -> no reduction grid axis."""
    acc = jnp.dot(x_ref[...], wx_ref[...], preferred_element_type=jnp.float32)
    acc = acc + jnp.dot(y_ref[...], wy_ref[...], preferred_element_type=jnp.float32)
    o_ref[...] = (acc + b_ref[...]).astype(o_ref.dtype)


def prepare_sum_fusion_params(wx, bx, wy, by, *, compute_dtype=jnp.float32):
    """One-time parameter preprocessing (call once, reuse across forwards).

    wx, wy: (D_out, D_in) PyTorch nn.Linear layout.  bx, by: (D_out,).
    Returns pre-transposed, lane-dense padded weights and the pre-summed bias.
    compute_dtype=jnp.bfloat16 is an explicit opt-in that changes numerics
    (~1e-2 relative) vs the fp32 PyTorch module.
    """
    D_out, D_in = wx.shape
    assert wy.shape == (D_out, D_in) and bx.shape == (D_out,) and by.shape == (D_out,)

    cdt = jnp.dtype(compute_dtype)
    Kp = _round_up(D_in, 128)                     # lane-aligned contraction dim
    Np = _round_up(D_out, 128)                    # lane-dense output dim
    bn = 256 if Np % 256 == 0 else 128            # output-lane tile

    def prep_w(w):
        wt = jnp.asarray(w).T.astype(cdt)         # (D_in, D_out)
        return jnp.pad(wt, ((0, Kp - D_in), (0, Np - D_out)))

    # Pre-summed bias, kept f32 (added to the f32 accumulator in the epilogue).
    b = (jnp.asarray(bx) + jnp.asarray(by)).astype(jnp.float32).reshape(1, D_out)
    b = jnp.pad(b, ((0, 0), (0, Np - D_out)))

    return {
        "wx": prep_w(wx), "wy": prep_w(wy), "b": b,
        "d_in": D_in, "d_out": D_out, "bn": bn,
        "compute_dtype": cdt,
    }


def sum_fusion_apply(params, x, y, *, bm=256, out_dtype=jnp.float32):
    """output = fc_x(x) + fc_y(y) using the pre-prepared parameters."""
    wx, wy, b = params["wx"], params["wy"], params["b"]
    D_in, D_out = params["d_in"], params["d_out"]
    bn = params["bn"]
    cdt = params["compute_dtype"]
    Kp, Np = wx.shape

    B = x.shape[0]
    # Sublane packing granule per itemsize (f32 -> 8, bf16 -> 16, fp8 -> 32).
    sub = {4: 8, 2: 16, 1: 32}[cdt.itemsize]
    bm = max(sub, min(_round_up(bm, sub), _round_up(B, sub)))
    Bp = _round_up(B, bm)
    # Give the parallel M axis >=2 tiles when batch allows it, so
    # dimension_semantics=("parallel", ...) can shard across v7x's two TCs.
    if Bp // bm < 2 and Bp >= 2 * sub:
        bm = _round_up(Bp // 2, sub)
        Bp = _round_up(B, bm)

    def prep_act(a):
        a = a.astype(cdt)
        if Bp != B or Kp != D_in:
            a = jnp.pad(a, ((0, Bp - B), (0, Kp - D_in)))
        return a

    xp, yp = prep_act(x), prep_act(y)

    # N outermost -> weight block index constant across consecutive M steps,
    # so the (Kp, bn) weight tiles stay resident in VMEM across batch tiles.
    grid = (Np // bn, Bp // bm)

    # Double-buffered VMEM footprint (Pallas double-buffers every operand).
    # TODO(synk): for very large D_in split K with a reduction grid axis; the
    # full-K blocks here assume Kp*(bm+2*bn) stays comfortably under VMEM.
    in_item = cdt.itemsize
    out_item = jnp.dtype(out_dtype).itemsize
    footprint = 2 * (
        2 * bm * Kp * in_item        # x and y activation tiles
        + 2 * Kp * bn * in_item      # wx^T and wy^T tiles
        + 8 * bn * 4                 # bias tile (padded to 8 sublanes, f32)
        + bm * bn * out_item         # output tile
    )
    vmem_limit = int(min(max(2 * footprint, 8 << 20), 64 << 20))

    out = pl.pallas_call(
        sum_fusion_kernel,
        out_shape=jax.ShapeDtypeStruct((Bp, Np), out_dtype),
        grid_spec=pltpu.PrefetchScalarGridSpec(
            num_scalar_prefetch=0,
            grid=grid,
            in_specs=[
                pl.BlockSpec((bm, Kp), lambda j, i: (i, 0)),   # x  (depends on M only)
                pl.BlockSpec((bm, Kp), lambda j, i: (i, 0)),   # y
                pl.BlockSpec((Kp, bn), lambda j, i: (0, j)),   # wx^T (resident across M)
                pl.BlockSpec((Kp, bn), lambda j, i: (0, j)),   # wy^T
                pl.BlockSpec((1, bn), lambda j, i: (0, j)),    # fused bias
            ],
            out_specs=pl.BlockSpec((bm, bn), lambda j, i: (i, j)),
        ),
        compiler_params=pltpu.CompilerParams(
            dimension_semantics=("parallel", "parallel"),
            vmem_limit_bytes=vmem_limit,
        ),
    )(xp, yp, wx, wy, b)

    if Bp != B or Np != D_out:
        out = out[:B, :D_out]
    return out


def sum_fusion(params, x, y, **kwargs):
    """Matches SumFusion.forward: returns (x, y, fc_x(x) + fc_y(y))."""
    return x, y, sum_fusion_apply(params, x, y, **kwargs)


if __name__ == "__main__":
    # Module-default feature dims (input_dim=512, output_dim=100), small batch.
    B, D_in, D_out = 16, 512, 100

    key = jax.random.PRNGKey(0)
    k_x, k_y, k_wx, k_bx, k_wy, k_by = jax.random.split(key, 6)

    x = jax.random.normal(k_x, (B, D_in), dtype=jnp.float32)
    y = jax.random.normal(k_y, (B, D_in), dtype=jnp.float32)

    # nn.Linear-style U(-1/sqrt(D_in), 1/sqrt(D_in)) init.
    bound = 1.0 / (D_in ** 0.5)
    wx = jax.random.uniform(k_wx, (D_out, D_in), jnp.float32, -bound, bound)
    bx = jax.random.uniform(k_bx, (D_out,), jnp.float32, -bound, bound)
    wy = jax.random.uniform(k_wy, (D_out, D_in), jnp.float32, -bound, bound)
    by = jax.random.uniform(k_by, (D_out,), jnp.float32, -bound, bound)

    # Parameter prep happens ONCE, outside the per-call path.
    params = prepare_sum_fusion_params(wx, bx, wy, by)

    x_out, y_out, out = sum_fusion(params, x, y)
    jax.block_until_ready(out)

    # fp32 reference (module semantics).  Tolerance allows for TPU matmul
    # precision (MXU bf16-pass f32 emulation) differences vs HIGHEST.
    hi = jax.lax.Precision.HIGHEST
    ref = (jnp.dot(x, wx.T, precision=hi) + bx) + (jnp.dot(y, wy.T, precision=hi) + by)

    assert out.shape == (B, D_out)
    max_err = float(jnp.max(jnp.abs(out - ref)))
    assert jnp.allclose(out, ref, atol=1e-2, rtol=1e-2), f"mismatch: {max_err}"
    assert x_out is x and y_out is y  # pass-through outputs, untouched

    print("KERNEL_OK")
</pallas_src>

<mosaic_0001>
module attributes {stable_mosaic.version = 11 : i64} {
  func.func @sum_fusion_kernel(%arg0: i32, %arg1: i32, %arg2: memref<8x512xf32, #tpu.memory_space<vmem>>, %arg3: memref<8x512xf32, #tpu.memory_space<vmem>>, %arg4: memref<512x128xf32, #tpu.memory_space<vmem>>, %arg5: memref<512x128xf32, #tpu.memory_space<vmem>>, %arg6: memref<1x128xf32, #tpu.memory_space<vmem>>, %arg7: memref<8x128xf32, #tpu.memory_space<vmem>>) attributes {dimension_semantics = [#tpu.dimension_semantics<parallel>, #tpu.dimension_semantics<parallel>], iteration_bounds = array<i64: 1, 2>, scalar_prefetch = 0 : i64, scratch_operands = 0 : i64, tpu.core_type = #tpu.core_type<tc>, window_params = [{transform_indices = @transform_0, window_bounds = array<i64: 8, 512>}, {transform_indices = @transform_1, window_bounds = array<i64: 8, 512>}, {transform_indices = @transform_2, window_bounds = array<i64: 512, 128>}, {transform_indices = @transform_3, window_bounds = array<i64: 512, 128>}, {transform_indices = @transform_4, window_bounds = array<i64: 1, 128>}, {transform_indices = @transform_5, window_bounds = array<i64: 8, 128>}]} {
    %c0 = arith.constant 0 : index
    %c0_0 = arith.constant 0 : index
    %0 = vector.load %arg2[%c0, %c0_0] : memref<8x512xf32, #tpu.memory_space<vmem>>, vector<8x512xf32>
    %c0_1 = arith.constant 0 : index
    %c0_2 = arith.constant 0 : index
    %1 = vector.load %arg4[%c0_1, %c0_2] : memref<512x128xf32, #tpu.memory_space<vmem>>, vector<512x128xf32>
    %cst = arith.constant dense<0.000000e+00> : vector<8x128xf32>
    %2 = tpu.matmul %0, %1, %cst {dimension_numbers = #tpu.dot_dimension_numbers<[1], [0], [0], [1], [0, 0, 1, 1], [], []>} : vector<8x512xf32>, vector<512x128xf32>, vector<8x128xf32> -> vector<8x128xf32>
    %c0_3 = arith.constant 0 : index
    %c0_4 = arith.constant 0 : index
    %3 = vector.load %arg3[%c0_3, %c0_4] : memref<8x512xf32, #tpu.memory_space<vmem>>, vector<8x512xf32>
    %c0_5 = arith.constant 0 : index
    %c0_6 = arith.constant 0 : index
    %4 = vector.load %arg5[%c0_5, %c0_6] : memref<512x128xf32, #tpu.memory_space<vmem>>, vector<512x128xf32>
    %cst_7 = arith.constant dense<0.000000e+00> : vector<8x128xf32>
    %5 = tpu.matmul %3, %4, %cst_7 {dimension_numbers = #tpu.dot_dimension_numbers<[1], [0], [0], [1], [0, 0, 1, 1], [], []>} : vector<8x512xf32>, vector<512x128xf32>, vector<8x128xf32> -> vector<8x128xf32>
    %6 = arith.addf %2, %5 : vector<8x128xf32>
    %c0_8 = arith.constant 0 : index
    %c0_9 = arith.constant 0 : index
    %7 = vector.load %arg6[%c0_8, %c0_9] : memref<1x128xf32, #tpu.memory_space<vmem>>, vector<1x128xf32>
    %8 = vector.broadcast %7 : vector<1x128xf32> to vector<8x128xf32>
    %9 = arith.addf %6, %8 : vector<8x128xf32>
    %c0_10 = arith.constant 0 : index
    %c0_11 = arith.constant 0 : index
    %10 = vector.load %arg7[%c0_10, %c0_11] : memref<8x128xf32, #tpu.memory_space<vmem>>, vector<8x128xf32>
    tpu.vector_store %arg7[%c0_10, %c0_11], %9 {strides = array<i32>} : memref<8x128xf32, #tpu.memory_space<vmem>>, vector<8x128xf32>,
    return
  }
  func.func @transform_0(%arg0: i32, %arg1: i32) -> (i32, i32) {
    %c0_i32 = arith.constant 0 : i32
    %c0_i32_0 = arith.constant 0 : i32
    return %arg1, %c0_i32 : i32, i32
  }
  func.func @transform_1(%arg0: i32, %arg1: i32) -> (i32, i32) {
    %c0_i32 = arith.constant 0 : i32
    %c0_i32_0 = arith.constant 0 : i32
    return %arg1, %c0_i32 : i32, i32
  }
  func.func @transform_2(%arg0: i32, %arg1: i32) -> (i32, i32) {
    %c0_i32 = arith.constant 0 : i32
    %c0_i32_0 = arith.constant 0 : i32
    return %c0_i32, %arg0 : i32, i32
  }
  func.func @transform_3(%arg0: i32, %arg1: i32) -> (i32, i32) {
    %c0_i32 = arith.constant 0 : i32
    %c0_i32_0 = arith.constant 0 : i32
    return %c0_i32, %arg0 : i32, i32
  }
  func.func @transform_4(%arg0: i32, %arg1: i32) -> (i32, i32) {
    %c0_i32 = arith.constant 0 : i32
    %c0_i32_0 = arith.constant 0 : i32
    return %c0_i32, %arg0 : i32, i32
  }
  func.func @transform_5(%arg0: i32, %arg1: i32) -> (i32, i32) {
    %c0_i32 = arith.constant 0 : i32
    return %arg1, %arg0 : i32, i32
  }
}

</mosaic_0001>

<llo_original>
// kernel: tpu_custom_call.1
$region0: #{tpu_custom_call.1}
  #allocation0 [shape = 'u32[]', space=smem, size = 0x4, offset = 0x4, fixed_abs, tag = 'smem constant byte address 0x4 - core index']
  #allocation1 [shape = 'u32[144,128]{1,0:T(1,128)}', space=vmem, size = 0x12000, scoped, tag = 'internal scratch']
  %s0 = inlined_call_operand.hbm [shape: f32[16,512], index: 0, kind: input, shape index: {}]
  %s1 = inlined_call_operand.hbm [shape: f32[16,512], index: 1, kind: input, shape index: {}]
  %s2 = inlined_call_operand.hbm [shape: f32[512,128], index: 2, kind: input, shape index: {}]
  %s3 = inlined_call_operand.hbm [shape: f32[512,128], index: 3, kind: input, shape index: {}]
  %s4 = inlined_call_operand.vmem [shape: f32[1,128], index: 4, kind: input, shape index: {}]
  %s5 = inlined_call_operand.hbm [shape: f32[16,128], index: 5, kind: output, shape index: {}]
  %s6 = sld [smem:[#allocation0]]
  $region69: #{tpu_custom_call.1} parent=0
    _
  %s8 = ssub.s32 1, %s6
  %s9 = scalar_select 0, %s8, %s6
  $region1: #{tpu_custom_call.1} parent=0
    #allocation2 [shape = 'u8[32768]{0}', space=vmem, size = 0x8000, scoped, tag = 'input window, operand 0']
    #allocation3 [shape = 's32[2]{0}', space=sflag, size = 0x8, scoped, tag = 'scoped memory for tpu_custom_call.1']
    #allocation4 [shape = 's32[2]{0}', space=sflag, size = 0x8, scoped, tag = 'scoped memory for tpu_custom_call.1']
    #allocation5 [shape = 'u8[32768]{0}', space=vmem, size = 0x8000, scoped, tag = 'input window, operand 1']
    #allocation6 [shape = 's32[2]{0}', space=sflag, size = 0x8, scoped, tag = 'scoped memory for tpu_custom_call.1']
    #allocation7 [shape = 'u8[262144]{0}', space=vmem, size = 0x40000, scoped, tag = 'input window, operand 2, single buffered']
    #allocation8 [shape = 'u8[262144]{0}', space=vmem, size = 0x40000, scoped, tag = 'input window, operand 3, single buffered']
    #allocation9 [shape = 's32[1]{0}', space=sflag, size = 0x4, scoped, tag = 'scoped memory for tpu_custom_call.1']
    #allocation10 [shape = 'u8[8192]{0}', space=vmem, size = 0x2000, scoped, tag = 'output window, operand 0']
    %10 = vsyncpa [#allocation3], 0
    %s11 = scalar_lea.sflag [#allocation3], 1
    %12 = vsyncpa %s11, 0
    %13 = vsyncpa [#allocation6], 0
    %s14 = scalar_lea.sflag [#allocation6], 1
    %15 = vsyncpa %s14, 0
    %16 = vsyncpa [#allocation9], 0
    %17 = vsyncpa [#allocation4], 0
    %s18 = scalar_lea.sflag [#allocation4], 1
    %19 = vsyncpa %s18, 0
    loop: start=0, step=1, limit=4
    $region2: #{tpu_custom_call.1} parent=1 // loop_pre_header
      _
    $region3: #{tpu_custom_call.1} parent=1 // loop_header
      %s21 = sphi 0, %s25
      %p22 = scmp.ge.s32.totalorder %s21, 4
      %s28 = sphi 0, %s40
      %s29 = sphi 0, %s36
      %s30 = sphi 0, %s28
      %s31 = sphi 0, %s29
      %s32 = sphi 0, %s30
      %s33 = sphi 0, %s31
      %s43 = sphi 0, %s45
      %s46 = sphi 0, %s43
      %s47 = sphi 0, %s46
      %s63 = sphi 0, %s47
      %s69 = sphi 0, %s71
      %s72 = sphi 0, %s69
      %s73 = sphi 0, %s72
      %s89 = sphi 0, %s73
      %s95 = sphi 0, %s97
      %s98 = sphi 0, %s95
      %s99 = sphi 0, %s98
      %s115 = sphi 0, %s99
      %s121 = sphi 0, %s123
      %s124 = sphi 0, %s121
      %s125 = sphi 0, %s124
      %s141 = sphi 0, %s125
      %s147 = sphi 0, %s149
      %s150 = sphi 0, %s147
      %s151 = sphi 0, %s150
      %s167 = sphi 0, %s151
      %s175 = sphi 0, %s177
      %s178 = sphi 0, %s175
      %s179 = sphi 0, %s178
      %s195 = sphi 0, %s179
    $region4: #{tpu_custom_call.1} parent=1 // loop_header_branch
      %24 = sbr.rel (%p22) target = $region8
    $region5: #{tpu_custom_call.1} parent=1 // loop_body
      %s26 = ssub.s32 %s21, 1
      %s27 = ssub.s32 %s21, 2
      %s34 = sadd.s32 1, %s29
      %p35 = scmp.ge.s32.totalorder %s34, 2
      %s36 = scalar_select %p35, 0, %s34
      %s37 = sadd.s32 1, %s28
      %s38 = scalar_select %p35, %s37, %s28
      %p39 = scmp.ge.s32.totalorder %s38, 1
      %s40 = scalar_select %p39, 0, %s38
      %s41 = ssub.s32 %s29, %s36
      %p42 = scmp.eq.s32.totalorder %s41, 0
      %s44 = sadd.s32 %s43, 1
      %s45 = scalar_select %p42, %s43, %s44
      %p48 = pneg %p42
      %p49 = scmp.eq.s32.totalorder %s21, 1
      %p50 = por %p48, %p49
      %p51 = scmp.ne.s32.totalorder %s43, %s46
      %p52 = scmp.eq.s32.totalorder %s21, 0
      %p53 = por %p51, %p52
      %p54 = scmp.ne.s32.totalorder %s43, %s46
      %p55 = scmp.eq.s32.totalorder %s26, 1
      %p56 = por %p54, %p55
      %p57 = scmp.ne.s32.totalorder %s46, %s47
      %p58 = scmp.eq.s32.totalorder %s26, 0
      %p59 = por %p57, %p58
      %p60 = scmp.ne.s32.totalorder %s46, %s47
      %p61 = scmp.eq.s32.totalorder %s27, 1
      %p62 = por %p60, %p61
      %p64 = scmp.ne.s32.totalorder %s47, %s63
      %p65 = scmp.eq.s32.totalorder %s27, 0
      %p66 = por %p64, %p65
      %s67 = ssub.s32 %s29, %s36
      %p68 = scmp.eq.s32.totalorder %s67, 0
      %s70 = sadd.s32 %s69, 1
      %s71 = scalar_select %p68, %s69, %s70
      %p74 = pneg %p68
      %p75 = scmp.eq.s32.totalorder %s21, 1
      %p76 = por %p74, %p75
      %p77 = scmp.ne.s32.totalorder %s69, %s72
      %p78 = scmp.eq.s32.totalorder %s21, 0
      %p79 = por %p77, %p78
      %p80 = scmp.ne.s32.totalorder %s69, %s72
      %p81 = scmp.eq.s32.totalorder %s26, 1
      %p82 = por %p80, %p81
      %p83 = scmp.ne.s32.totalorder %s72, %s73
      %p84 = scmp.eq.s32.totalorder %s26, 0
      %p85 = por %p83, %p84
      %p86 = scmp.ne.s32.totalorder %s72, %s73
      %p87 = scmp.eq.s32.totalorder %s27, 1
      %p88 = por %p86, %p87
      %p90 = scmp.ne.s32.totalorder %s73, %s89
      %p91 = scmp.eq.s32.totalorder %s27, 0
      %p92 = por %p90, %p91
      %s93 = ssub.s32 %s28, %s40
      %p94 = scmp.eq.s32.totalorder %s93, 0
      %s96 = sadd.s32 %s95, 1
      %s97 = scalar_select %p94, %s95, %s96
      %p100 = pneg %p94
      %p101 = scmp.eq.s32.totalorder %s21, 1
      %p102 = por %p100, %p101
      %p103 = scmp.ne.s32.totalorder %s95, %s98
      %p104 = scmp.eq.s32.totalorder %s21, 0
      %p105 = por %p103, %p104
      %p106 = scmp.ne.s32.totalorder %s95, %s98
      %p107 = scmp.eq.s32.totalorder %s26, 1
      %p108 = por %p106, %p107
      %p109 = scmp.ne.s32.totalorder %s98, %s99
      %p110 = scmp.eq.s32.totalorder %s26, 0
      %p111 = por %p109, %p110
      %p112 = scmp.ne.s32.totalorder %s98, %s99
      %p113 = scmp.eq.s32.totalorder %s27, 1
      %p114 = por %p112, %p113
      %p116 = scmp.ne.s32.totalorder %s99, %s115
      %p117 = scmp.eq.s32.totalorder %s27, 0
      %p118 = por %p116, %p117
      %s119 = ssub.s32 %s28, %s40
      %p120 = scmp.eq.s32.totalorder %s119, 0
      %s122 = sadd.s32 %s121, 1
      %s123 = scalar_select %p120, %s121, %s122
      %p126 = pneg %p120
      %p127 = scmp.eq.s32.totalorder %s21, 1
      %p128 = por %p126, %p127
      %p129 = scmp.ne.s32.totalorder %s121, %s124
      %p130 = scmp.eq.s32.totalorder %s21, 0
      %p131 = por %p129, %p130
      %p132 = scmp.ne.s32.totalorder %s121, %s124
      %p133 = scmp.eq.s32.totalorder %s26, 1
      %p134 = por %p132, %p133
      %p135 = scmp.ne.s32.totalorder %s124, %s125
      %p136 = scmp.eq.s32.totalorder %s26, 0
      %p137 = por %p135, %p136
      %p138 = scmp.ne.s32.totalorder %s124, %s125
      %p139 = scmp.eq.s32.totalorder %s27, 1
      %p140 = por %p138, %p139
      %p142 = scmp.ne.s32.totalorder %s125, %s141
      %p143 = scmp.eq.s32.totalorder %s27, 0
      %p144 = por %p142, %p143
      %s145 = ssub.s32 %s28, %s40
      %p146 = scmp.eq.s32.totalorder %s145, 0
      %s148 = sadd.s32 %s147, 1
      %s149 = scalar_select %p146, %s147, %s148
      %p152 = pneg %p146
      %p153 = scmp.eq.s32.totalorder %s21, 1
      %p154 = por %p152, %p153
      %p155 = scmp.ne.s32.totalorder %s147, %s150
      %p156 = scmp.eq.s32.totalorder %s21, 0
      %p157 = por %p155, %p156
      %p158 = scmp.ne.s32.totalorder %s147, %s150
      %p159 = scmp.eq.s32.totalorder %s26, 1
      %p160 = por %p158, %p159
      %p161 = scmp.ne.s32.totalorder %s150, %s151
      %p162 = scmp.eq.s32.totalorder %s26, 0
      %p163 = por %p161, %p162
      %p164 = scmp.ne.s32.totalorder %s150, %s151
      %p165 = scmp.eq.s32.totalorder %s27, 1
      %p166 = por %p164, %p165
      %p168 = scmp.ne.s32.totalorder %s151, %s167
      %p169 = scmp.eq.s32.totalorder %s27, 0
      %p170 = por %p168, %p169
      %s171 = ssub.s32 %s29, %s36
      %s172 = ssub.s32 %s28, %s40
      %s173 = sor.u32 %s171, %s172
      %p174 = scmp.eq.s32.totalorder %s173, 0
      %s176 = sadd.s32 %s175, 1
      %s177 = scalar_select %p174, %s175, %s176
      %p180 = pneg %p174
      %p181 = scmp.eq.s32.totalorder %s21, 1
      %p182 = por %p180, %p181
      %p183 = scmp.ne.s32.totalorder %s175, %s178
      %p184 = scmp.eq.s32.totalorder %s21, 0
      %p185 = por %p183, %p184
      %p186 = scmp.ne.s32.totalorder %s175, %s178
      %p187 = scmp.eq.s32.totalorder %s26, 1
      %p188 = por %p186, %p187
      %p189 = scmp.ne.s32.totalorder %s178, %s179
      %p190 = scmp.eq.s32.totalorder %s26, 0
      %p191 = por %p189, %p190
      %p192 = scmp.ne.s32.totalorder %s178, %s179
      %p193 = scmp.eq.s32.totalorder %s27, 1
      %p194 = por %p192, %p193
      %p196 = scmp.ne.s32.totalorder %s179, %s195
      %p197 = scmp.eq.s32.totalorder %s27, 0
      %p198 = por %p196, %p197
      %p199 = scmp.le.s32.totalorder 1, %s21
      %p200 = scmp.lt.s32.totalorder %s21, 3
      %p201 = pnand %p199, %p200
      %p202 = pneg %p201
      // Predicated region
      $region9: #{tpu_custom_call.1} parent=5 // pred_check
        _
      $region10: #{tpu_custom_call.1} parent=5 // pred_check_branch
        %204 = sbr.rel (%p201) target = $region12
      $region11: #{tpu_custom_call.1} parent=5 // pred_region
        %s205 = ssub.s32 %s21, 1
        // Predicated region
        $region13: #{tpu_custom_call.1} parent=11 // pred_check
          %p206 = pneg %p111
        $region14: #{tpu_custom_call.1} parent=11 // pred_check_branch
          %208 = sbr.rel (%p206) target = $region16
        $region15: #{tpu_custom_call.1} parent=11 // pred_region
          %s210 = ssub.s32 8192, 8192
          %211 = vsyncadd [#allocation6], %s210
          %s212 = smul.addr %s30, 128
          %s213 = scalar_lea.hbm %s2, %s212
          %s214 = sshll.u32 [#allocation7], 4
          %s215 = int_to_ptr.vmem [resolvable:$true] %s214
          %220 = dma.hbm_to_vmem [thread:$0]  %s213, 8192, %s215, [#allocation6], 128, 128, 8
        $region16: #{tpu_custom_call.1} parent=11 // pred_fallthru
          _
        // Predicated region
        $region17: #{tpu_custom_call.1} parent=11 // pred_check
          %p221 = pneg %p137
        $region18: #{tpu_custom_call.1} parent=11 // pred_check_branch
          %223 = sbr.rel (%p221) target = $region20
        $region19: #{tpu_custom_call.1} parent=11 // pred_region
          %s225 = ssub.s32 8192, 8192
          %226 = vsyncadd [#allocation9], %s225
          %s227 = smul.addr %s30, 128
          %s228 = scalar_lea.hbm %s3, %s227
          %s229 = sshll.u32 [#allocation8], 4
          %s230 = int_to_ptr.vmem [resolvable:$true] %s229
          %235 = dma.hbm_to_vmem [thread:$0]  %s228, 8192, %s230, [#allocation9], 128, 128, 8
        $region20: #{tpu_custom_call.1} parent=11 // pred_fallthru
          _
        // Predicated region
        $region21: #{tpu_custom_call.1} parent=11 // pred_check
          %p236 = pneg %p163
        $region22: #{tpu_custom_call.1} parent=11 // pred_check_branch
          %238 = sbr.rel (%p236) target = $region24
        $region23: #{tpu_custom_call.1} parent=11 // pred_region
          %p239 = scmp.lt.s32.totalorder %s30, 0
          %s240 = scalar_select %p239, %s30, 0
          %s241 = scalar_lea.vmem %s4, %s240
        $region24: #{tpu_custom_call.1} parent=11 // pred_fallthru
          _
      $region12: #{tpu_custom_call.1} parent=5 // pred_fallthru
        _
      %p242 = scmp.lt.s32.totalorder %s21, 2
      // Predicated region
      $region25: #{tpu_custom_call.1} parent=5 // pred_check
        %p243 = pneg %p242
      $region26: #{tpu_custom_call.1} parent=5 // pred_check_branch
        %245 = sbr.rel (%p243) target = $region28
      $region27: #{tpu_custom_call.1} parent=5 // pred_region
        // Predicated region
        $region29: #{tpu_custom_call.1} parent=27 // pred_check
          %p246 = pneg %p53
        $region30: #{tpu_custom_call.1} parent=27 // pred_check_branch
          %248 = sbr.rel (%p246) target = $region32
        $region31: #{tpu_custom_call.1} parent=27 // pred_region
          %s249 = sand.u32 %s43, 1
          %s250 = scalar_lea.sflag [#allocation3], %s249
          %s251 = sand.u32 %s43, 1
          %s252 = smul.addr %s251, 32
          %s253 = scalar_lea.vmem [#allocation2], %s252
          %s255 = ssub.s32 512, 512
          %256 = vsyncadd %s250, %s255
          %s257 = smul.addr %s29, 4
          %s258 = smul.addr %s257, 128
          %s259 = scalar_lea.hbm %s0, %s258
          %s261 = sshll.u32 %s253, 4
          %s262 = int_to_ptr.vmem [resolvable:$true] %s261
          %264 = dma.hbm_to_vmem [thread:$0]  %s259, 512, %s262, %s250
        $region32: #{tpu_custom_call.1} parent=27 // pred_fallthru
          _
        // Predicated region
        $region33: #{tpu_custom_call.1} parent=27 // pred_check
          %p265 = pneg %p79
        $region34: #{tpu_custom_call.1} parent=27 // pred_check_branch
          %267 = sbr.rel (%p265) target = $region36
        $region35: #{tpu_custom_call.1} parent=27 // pred_region
          %s268 = sand.u32 %s21, 1
          %s269 = scalar_lea.sflag [#allocation6], %s268
          %s270 = sand.u32 %s69, 1
          %s271 = smul.addr %s270, 32
          %s272 = scalar_lea.vmem [#allocation5], %s271
          %s274 = ssub.s32 512, 512
          %275 = vsyncadd %s269, %s274
          %s276 = smul.addr %s29, 4
          %s277 = smul.addr %s276, 128
          %s278 = scalar_lea.hbm %s1, %s277
          %s280 = sshll.u32 %s272, 4
          %s281 = int_to_ptr.vmem [resolvable:$true] %s280
          %283 = dma.hbm_to_vmem [thread:$0]  %s278, 512, %s281, %s269
        $region36: #{tpu_custom_call.1} parent=27 // pred_fallthru
          _
      $region28: #{tpu_custom_call.1} parent=5 // pred_fallthru
        _
      %p284 = scmp.le.s32.totalorder 1, %s21
      %p285 = scmp.lt.s32.totalorder %s21, 3
      %p286 = pnand %p284, %p285
      %p287 = pneg %p286
      // Predicated region
      $region37: #{tpu_custom_call.1} parent=5 // pred_check
        _
      $region38: #{tpu_custom_call.1} parent=5 // pred_check_branch
        %289 = sbr.rel (%p286) target = $region40
      $region39: #{tpu_custom_call.1} parent=5 // pred_region
        %s290 = ssub.s32 %s21, 1
        %s291 = sand.u32 %s46, 1
        %s292 = scalar_lea.sflag [#allocation3], %s291
        %s293 = sand.u32 %s46, 1
        %s294 = smul.addr %s293, 32
        %s295 = scalar_lea.vmem [#allocation2], %s294
        // Predicated region
        $region41: #{tpu_custom_call.1} parent=39 // pred_check
          %p296 = pneg %p59
        $region42: #{tpu_custom_call.1} parent=39 // pred_check_branch
          %298 = sbr.rel (%p296) target = $region44
        $region43: #{tpu_custom_call.1} parent=39 // pred_region
          %299 = dma.done %s292, 512
        $region44: #{tpu_custom_call.1} parent=39 // pred_fallthru
          _
        %s300 = sand.u32 %s26, 1
        %s301 = scalar_lea.sflag [#allocation6], %s300
        %s302 = sand.u32 %s72, 1
        %s303 = smul.addr %s302, 32
        %s304 = scalar_lea.vmem [#allocation5], %s303
        // Predicated region
        $region45: #{tpu_custom_call.1} parent=39 // pred_check
          %p305 = pneg %p85
        $region46: #{tpu_custom_call.1} parent=39 // pred_check_branch
          %307 = sbr.rel (%p305) target = $region48
        $region47: #{tpu_custom_call.1} parent=39 // pred_region
          %308 = dma.done %s301, 512
        $region48: #{tpu_custom_call.1} parent=39 // pred_fallthru
          _
        // Predicated region
        $region49: #{tpu_custom_call.1} parent=39 // pred_check
          %p309 = pneg %p111
        $region50: #{tpu_custom_call.1} parent=39 // pred_check_branch
          %311 = sbr.rel (%p309) target = $region52
        $region51: #{tpu_custom_call.1} parent=39 // pred_region
          %312 = dma.done [#allocation6], 8192
        $region52: #{tpu_custom_call.1} parent=39 // pred_fallthru
          _
        // Predicated region
        $region53: #{tpu_custom_call.1} parent=39 // pred_check
          %p313 = pneg %p137
        $region54: #{tpu_custom_call.1} parent=39 // pred_check_branch
          %315 = sbr.rel (%p313) target = $region56
        $region55: #{tpu_custom_call.1} parent=39 // pred_region
          %316 = dma.done [#allocation9], 8192
        $region56: #{tpu_custom_call.1} parent=39 // pred_fallthru
          _
        %s317 = sand.u32 %s46, 1
        %s318 = scalar_lea.sflag [#allocation3], %s317
        %s319 = sand.u32 %s46, 1
        %s320 = smul.addr %s319, 32
        %s321 = scalar_lea.vmem [#allocation2], %s320
        %p322 = pneg %p59
        %p323 = pneg %p56
        %s324 = sand.u32 %s26, 1
        %s325 = scalar_lea.sflag [#allocation6], %s324
        %s326 = sand.u32 %s72, 1
        %s327 = smul.addr %s326, 32
        %s328 = scalar_lea.vmem [#allocation5], %s327
        %p329 = pneg %p85
        %p330 = pneg %p82
        %p331 = pneg %p111
        %p332 = pneg %p108
        %p333 = pneg %p137
        %p334 = pneg %p134
        %p335 = scmp.lt.s32.totalorder %s30, 0
        %s336 = scalar_select %p335, %s30, 0
        %s337 = scalar_lea.vmem %s4, %s336
        %p338 = pneg %p163
        %p339 = pneg %p160
        %p340 = pneg %p191
        %p341 = pneg %p188
        %s342 = sand.u32 %s178, 1
        %s343 = scalar_lea.sflag [#allocation4], %s342
        %s344 = sand.u32 %s178, 1
        %s345 = smul.addr %s344, 8
        %s346 = scalar_lea.vmem [#allocation10], %s345
        %p347 = scmp.lt.s32.totalorder %s30, 0
        %s348 = scalar_select %p347, %s30, 0
        %s349 = scalar_lea.vmem %s4, %s348
        %v350 = vld [vmem:[%s295] sm:$0xff]
        %v351 = vld [vmem:[%s295 + $0x8] sm:$0xff]
        %v352 = vld [vmem:[%s295 + $0x10] sm:$0xff]
        %v353 = vld [vmem:[%s295 + $0x18] sm:$0xff]
        %v354 = vld [vmem:[#allocation7] sm:$0xff]
        %v355 = vld [vmem:[#allocation7 + $0x8] sm:$0xff]
        %v356 = vld [vmem:[#allocation7 + $0x10] sm:$0xff]
        %v357 = vld [vmem:[#allocation7 + $0x18] sm:$0xff]
        %v358 = vld [vmem:[#allocation7 + $0x20] sm:$0xff]
        %v359 = vld [vmem:[#allocation7 + $0x28] sm:$0xff]
        %v360 = vld [vmem:[#allocation7 + $0x30] sm:$0xff]
        %v361 = vld [vmem:[#allocation7 + $0x38] sm:$0xff]
        %v362 = vld [vmem:[#allocation7 + $0x40] sm:$0xff]
        %v363 = vld [vmem:[#allocation7 + $0x48] sm:$0xff]
        %v364 = vld [vmem:[#allocation7 + $0x50] sm:$0xff]
        %v365 = vld [vmem:[#allocation7 + $0x58] sm:$0xff]
        %v366 = vld [vmem:[#allocation7 + $0x60] sm:$0xff]
        %v367 = vld [vmem:[#allocation7 + $0x68] sm:$0xff]
        %v368 = vld [vmem:[#allocation7 + $0x70] sm:$0xff]
        %v369 = vld [vmem:[#allocation7 + $0x78] sm:$0xff]
        %v370 = vld [vmem:[#allocation7 + $0x80] sm:$0xff]
        %v371 = vld [vmem:[#allocation7 + $0x88] sm:$0xff]
        %v372 = vld [vmem:[#allocation7 + $0x90] sm:$0xff]
        %v373 = vld [vmem:[#allocation7 + $0x98] sm:$0xff]
        %v374 = vld [vmem:[#allocation7 + $0xa0] sm:$0xff]
        %v375 = vld [vmem:[#allocation7 + $0xa8] sm:$0xff]
        %v376 = vld [vmem:[#allocation7 + $0xb0] sm:$0xff]
        %v377 = vld [vmem:[#allocation7 + $0xb8] sm:$0xff]
        %v378 = vld [vmem:[#allocation7 + $0xc0] sm:$0xff]
        %v379 = vld [vmem:[#allocation7 + $0xc8] sm:$0xff]
        %v380 = vld [vmem:[#allocation7 + $0xd0] sm:$0xff]
        %v381 = vld [vmem:[#allocation7 + $0xd8] sm:$0xff]
        %v382 = vld [vmem:[#allocation7 + $0xe0] sm:$0xff]
        %v383 = vld [vmem:[#allocation7 + $0xe8] sm:$0xff]
        %v384 = vld [vmem:[#allocation7 + $0xf0] sm:$0xff]
        %v385 = vld [vmem:[#allocation7 + $0xf8] sm:$0xff]
        %v386 = vld [vmem:[#allocation7 + $0x100] sm:$0xff]
        %v387 = vld [vmem:[#allocation7 + $0x108] sm:$0xff]
        %v388 = vld [vmem:[#allocation7 + $0x110] sm:$0xff]
        %v389 = vld [vmem:[#allocation7 + $0x118] sm:$0xff]
        %v390 = vld [vmem:[#allocation7 + $0x120] sm:$0xff]
        %v391 = vld [vmem:[#allocation7 + $0x128] sm:$0xff]
        %v392 = vld [vmem:[#allocation7 + $0x130] sm:$0xff]
        %v393 = vld [vmem:[#allocation7 + $0x138] sm:$0xff]
        %v394 = vld [vmem:[#allocation7 + $0x140] sm:$0xff]
        %v395 = vld [vmem:[#allocation7 + $0x148] sm:$0xff]
        %v396 = vld [vmem:[#allocation7 + $0x150] sm:$0xff]
        %v397 = vld [vmem:[#allocation7 + $0x158] sm:$0xff]
        %v398 = vld [vmem:[#allocation7 + $0x160] sm:$0xff]
        %v399 = vld [vmem:[#allocation7 + $0x168] sm:$0xff]
        %v400 = vld [vmem:[#allocation7 + $0x170] sm:$0xff]
        %v401 = vld [vmem:[#allocation7 + $0x178] sm:$0xff]
        %v402 = vld [vmem:[#allocation7 + $0x180] sm:$0xff]
        %v403 = vld [vmem:[#allocation7 + $0x188] sm:$0xff]
        %v404 = vld [vmem:[#allocation7 + $0x190] sm:$0xff]
        %v405 = vld [vmem:[#allocation7 + $0x198] sm:$0xff]
        %v406 = vld [vmem:[#allocation7 + $0x1a0] sm:$0xff]
        %v407 = vld [vmem:[#allocation7 + $0x1a8] sm:$0xff]
        %v408 = vld [vmem:[#allocation7 + $0x1b0] sm:$0xff]
        %v409 = vld [vmem:[#allocation7 + $0x1b8] sm:$0xff]
        %v410 = vld [vmem:[#allocation7 + $0x1c0] sm:$0xff]
        %v411 = vld [vmem:[#allocation7 + $0x1c8] sm:$0xff]
        %v412 = vld [vmem:[#allocation7 + $0x1d0] sm:$0xff]
        %v413 = vld [vmem:[#allocation7 + $0x1d8] sm:$0xff]
        %v414 = vld [vmem:[#allocation7 + $0x1e0] sm:$0xff]
        %v415 = vld [vmem:[#allocation7 + $0x1e8] sm:$0xff]
        %v416 = vld [vmem:[#allocation7 + $0x1f0] sm:$0xff]
        %v417 = vld [vmem:[#allocation7 + $0x1f8] sm:$0xff]
        %v418 = vld [vmem:[%s304] sm:$0xff]
        %v419 = vld [vmem:[%s304 + $0x8] sm:$0xff]
        %v420 = vld [vmem:[%s304 + $0x10] sm:$0xff]
        %v421 = vld [vmem:[%s304 + $0x18] sm:$0xff]
        %v422 = vld [vmem:[#allocation8] sm:$0xff]
        %v423 = vld [vmem:[#allocation8 + $0x8] sm:$0xff]
        %v424 = vld [vmem:[#allocation8 + $0x10] sm:$0xff]
        %v425 = vld [vmem:[#allocation8 + $0x18] sm:$0xff]
        %v426 = vld [vmem:[#allocation8 + $0x20] sm:$0xff]
        %v427 = vld [vmem:[#allocation8 + $0x28] sm:$0xff]
        %v428 = vld [vmem:[#allocation8 + $0x30] sm:$0xff]
        %v429 = vld [vmem:[#allocation8 + $0x38] sm:$0xff]
        %v430 = vld [vmem:[#allocation8 + $0x40] sm:$0xff]
        %v431 = vld [vmem:[#allocation8 + $0x48] sm:$0xff]
        %v432 = vld [vmem:[#allocation8 + $0x50] sm:$0xff]
        %v433 = vld [vmem:[#allocation8 + $0x58] sm:$0xff]
        %v434 = vld [vmem:[#allocation8 + $0x60] sm:$0xff]
        %v435 = vld [vmem:[#allocation8 + $0x68] sm:$0xff]
        %v436 = vld [vmem:[#allocation8 + $0x70] sm:$0xff]
        %v437 = vld [vmem:[#allocation8 + $0x78] sm:$0xff]
        %v438 = vld [vmem:[#allocation8 + $0x80] sm:$0xff]
        %v439 = vld [vmem:[#allocation8 + $0x88] sm:$0xff]
        %v440 = vld [vmem:[#allocation8 + $0x90] sm:$0xff]
        %v441 = vld [vmem:[#allocation8 + $0x98] sm:$0xff]
        %v442 = vld [vmem:[#allocation8 + $0xa0] sm:$0xff]
        %v443 = vld [vmem:[#allocation8 + $0xa8] sm:$0xff]
        %v444 = vld [vmem:[#allocation8 + $0xb0] sm:$0xff]
        %v445 = vld [vmem:[#allocation8 + $0xb8] sm:$0xff]
        %v446 = vld [vmem:[#allocation8 + $0xc0] sm:$0xff]
        %v447 = vld [vmem:[#allocation8 + $0xc8] sm:$0xff]
        %v448 = vld [vmem:[#allocation8 + $0xd0] sm:$0xff]
        %v449 = vld [vmem:[#allocation8 + $0xd8] sm:$0xff]
        %v450 = vld [vmem:[#allocation8 + $0xe0] sm:$0xff]
        %v451 = vld [vmem:[#allocation8 + $0xe8] sm:$0xff]
        %v452 = vld [vmem:[#allocation8 + $0xf0] sm:$0xff]
        %v453 = vld [vmem:[#allocation8 + $0xf8] sm:$0xff]
        %v454 = vld [vmem:[#allocation8 + $0x100] sm:$0xff]
        %v455 = vld [vmem:[#allocation8 + $0x108] sm:$0xff]
        %v456 = vld [vmem:[#allocation8 + $0x110] sm:$0xff]
        %v457 = vld [vmem:[#allocation8 + $0x118] sm:$0xff]
        %v458 = vld [vmem:[#allocation8 + $0x120] sm:$0xff]
        %v459 = vld [vmem:[#allocation8 + $0x128] sm:$0xff]
        %v460 = vld [vmem:[#allocation8 + $0x130] sm:$0xff]
        %v461 = vld [vmem:[#allocation8 + $0x138] sm:$0xff]
        %v462 = vld [vmem:[#allocation8 + $0x140] sm:$0xff]
        %v463 = vld [vmem:[#allocation8 + $0x148] sm:$0xff]
        %v464 = vld [vmem:[#allocation8 + $0x150] sm:$0xff]
        %v465 = vld [vmem:[#allocation8 + $0x158] sm:$0xff]
        %v466 = vld [vmem:[#allocation8 + $0x160] sm:$0xff]
        %v467 = vld [vmem:[#allocation8 + $0x168] sm:$0xff]
        %v468 = vld [vmem:[#allocation8 + $0x170] sm:$0xff]
        %v469 = vld [vmem:[#allocation8 + $0x178] sm:$0xff]
        %v470 = vld [vmem:[#allocation8 + $0x180] sm:$0xff]
        %v471 = vld [vmem:[#allocation8 + $0x188] sm:$0xff]
        %v472 = vld [vmem:[#allocation8 + $0x190] sm:$0xff]
        %v473 = vld [vmem:[#allocation8 + $0x198] sm:$0xff]
        %v474 = vld [vmem:[#allocation8 + $0x1a0] sm:$0xff]
        %v475 = vld [vmem:[#allocation8 + $0x1a8] sm:$0xff]
        %v476 = vld [vmem:[#allocation8 + $0x1b0] sm:$0xff]
        %v477 = vld [vmem:[#allocation8 + $0x1b8] sm:$0xff]
        %v478 = vld [vmem:[#allocation8 + $0x1c0] sm:$0xff]
        %v479 = vld [vmem:[#allocation8 + $0x1c8] sm:$0xff]
        %v480 = vld [vmem:[#allocation8 + $0x1d0] sm:$0xff]
        %v481 = vld [vmem:[#allocation8 + $0x1d8] sm:$0xff]
        %v482 = vld [vmem:[#allocation8 + $0x1e0] sm:$0xff]
        %v483 = vld [vmem:[#allocation8 + $0x1e8] sm:$0xff]
        %v484 = vld [vmem:[#allocation8 + $0x1f0] sm:$0xff]
        %v485 = vld [vmem:[#allocation8 + $0x1f8] sm:$0xff]
        %486 = vmatprep.subr.mxu0 0.0
        %487 = vmatpush1.msra.mxu0 %v437
        %488 = vmatprep.subr.mxu0 0.0
        %489 = vmatpush1.msra.mxu0 %v436
        %490 = vmatprep.subr.mxu0 0.0
        %491 = vmatpush1.msra.mxu0 %v435
        %492 = vmatprep.subr.mxu0 0.0
        %493 = vmatpush1.msra.mxu0 %v434
        %494 = vmatprep.subr.mxu0 0.0
        %495 = vmatpush1.msra.mxu0 %v433
        %496 = vmatprep.subr.mxu0 0.0
        %497 = vmatpush1.msra.mxu0 %v432
        %498 = vmatprep.subr.mxu0 0.0
        %499 = vmatpush1.msra.mxu0 %v431
        %500 = vmatprep.subr.mxu0 0.0
        %501 = vmatpush1.msra.mxu0 %v430
        %502 = vmatprep.subr.mxu0 0.0
        %503 = vmatpush1.msra.mxu0 %v429
        %504 = vmatprep.subr.mxu0 0.0
        %505 = vmatpush1.msra.mxu0 %v428
        %506 = vmatprep.subr.mxu0 0.0
        %507 = vmatpush1.msra.mxu0 %v427
        %508 = vmatprep.subr.mxu0 0.0
        %509 = vmatpush1.msra.mxu0 %v426
        %510 = vmatprep.subr.mxu0 0.0
        %511 = vmatpush1.msra.mxu0 %v425
        %512 = vmatprep.subr.mxu0 0.0
        %513 = vmatpush1.msra.mxu0 %v424
        %514 = vmatprep.subr.mxu0 0.0
        %515 = vmatpush1.msra.mxu0 %v423
        %516 = vmatprep.subr.mxu0 0.0
        %517 = vmatpush1.msra.mxu0 %v422
        %518 = vmatprep.subr.mxu0 0.0
        %519 = vmatpush2.msra.mxu0 %v453
        %520 = vmatprep.subr.mxu0 0.0
        %521 = vmatpush2.msra.mxu0 %v452
        %522 = vmatprep.subr.mxu0 0.0
        %523 = vmatpush2.msra.mxu0 %v451
        %524 = vmatprep.subr.mxu0 0.0
        %525 = vmatpush2.msra.mxu0 %v450
        %526 = vmatprep.subr.mxu0 0.0
        %527 = vmatpush2.msra.mxu0 %v449
        %528 = vmatprep.subr.mxu0 0.0
        %529 = vmatpush2.msra.mxu0 %v448
        %530 = vmatprep.subr.mxu0 0.0
        %531 = vmatpush2.msra.mxu0 %v447
        %532 = vmatprep.subr.mxu0 0.0
        %533 = vmatpush2.msra.mxu0 %v446
        %534 = vmatprep.subr.mxu0 0.0
        %535 = vmatpush2.msra.mxu0 %v445
        %536 = vmatprep.subr.mxu0 0.0
        %537 = vmatpush2.msra.mxu0 %v444
        %538 = vmatprep.subr.mxu0 0.0
        %539 = vmatpush2.msra.mxu0 %v443
        %540 = vmatprep.subr.mxu0 0.0
        %541 = vmatpush2.msra.mxu0 %v442
        %542 = vmatprep.subr.mxu0 0.0
        %543 = vmatpush2.msra.mxu0 %v441
        %544 = vmatprep.subr.mxu0 0.0
        %545 = vmatpush2.msra.mxu0 %v440
        %546 = vmatprep.subr.mxu0 0.0
        %547 = vmatpush2.msra.mxu0 %v439
        %548 = vmatprep.subr.mxu0 0.0
        %549 = vmatpush2.msra.mxu0 %v438
        %550 = vmatprep.mubr.f32.mxu0 %v419
        %551 = vmatmul.mubr.f32.gmra.mxu0 %v418
        %v552 = vpop.f32.mrf.mxu0
        %v553 = vadd.f32 0.0, %v552
        %v554 = vpop.f32.mrf.mxu0
        %555 = vdwg.mxu0
        %556 = vmatprep.subr.mxu0 0.0
        %557 = vmatpush1.msra.mxu0 %v469
        %558 = vmatprep.subr.mxu0 0.0
        %559 = vmatpush1.msra.mxu0 %v468
        %560 = vmatprep.subr.mxu0 0.0
        %561 = vmatpush1.msra.mxu0 %v467
        %562 = vmatprep.subr.mxu0 0.0
        %563 = vmatpush1.msra.mxu0 %v466
        %564 = vmatprep.subr.mxu0 0.0
        %565 = vmatpush1.msra.mxu0 %v465
        %566 = vmatprep.subr.mxu0 0.0
        %567 = vmatpush1.msra.mxu0 %v464
        %568 = vmatprep.subr.mxu0 0.0
        %569 = vmatpush1.msra.mxu0 %v463
        %570 = vmatprep.subr.mxu0 0.0
        %571 = vmatpush1.msra.mxu0 %v462
        %572 = vmatprep.subr.mxu0 0.0
        %573 = vmatpush1.msra.mxu0 %v461
        %574 = vmatprep.subr.mxu0 0.0
        %575 = vmatpush1.msra.mxu0 %v460
        %576 = vmatprep.subr.mxu0 0.0
        %577 = vmatpush1.msra.mxu0 %v459
        %578 = vmatprep.subr.mxu0 0.0
        %579 = vmatpush1.msra.mxu0 %v458
        %580 = vmatprep.subr.mxu0 0.0
        %581 = vmatpush1.msra.mxu0 %v457
        %582 = vmatprep.subr.mxu0 0.0
        %583 = vmatpush1.msra.mxu0 %v456
        %584 = vmatprep.subr.mxu0 0.0
        %585 = vmatpush1.msra.mxu0 %v455
        %586 = vmatprep.subr.mxu0 0.0
        %587 = vmatpush1.msra.mxu0 %v454
        %588 = vmatprep.subr.mxu0 0.0
        %589 = vmatpush2.msra.mxu0 %v485
        %590 = vmatprep.subr.mxu0 0.0
        %591 = vmatpush2.msra.mxu0 %v484
        %592 = vmatprep.subr.mxu0 0.0
        %593 = vmatpush2.msra.mxu0 %v483
        %594 = vmatprep.subr.mxu0 0.0
        %595 = vmatpush2.msra.mxu0 %v482
        %596 = vmatprep.subr.mxu0 0.0
        %597 = vmatpush2.msra.mxu0 %v481
        %598 = vmatprep.subr.mxu0 0.0
        %599 = vmatpush2.msra.mxu0 %v480
        %600 = vmatprep.subr.mxu0 0.0
        %601 = vmatpush2.msra.mxu0 %v479
        %602 = vmatprep.subr.mxu0 0.0
        %603 = vmatpush2.msra.mxu0 %v478
        %604 = vmatprep.subr.mxu0 0.0
        %605 = vmatpush2.msra.mxu0 %v477
        %606 = vmatprep.subr.mxu0 0.0
        %607 = vmatpush2.msra.mxu0 %v476
        %608 = vmatprep.subr.mxu0 0.0
        %609 = vmatpush2.msra.mxu0 %v475
        %610 = vmatprep.subr.mxu0 0.0
        %611 = vmatpush2.msra.mxu0 %v474
        %612 = vmatprep.subr.mxu0 0.0
        %613 = vmatpush2.msra.mxu0 %v473
        %614 = vmatprep.subr.mxu0 0.0
        %615 = vmatpush2.msra.mxu0 %v472
        %616 = vmatprep.subr.mxu0 0.0
        %617 = vmatpush2.msra.mxu0 %v471
        %618 = vmatprep.subr.mxu0 0.0
        %619 = vmatpush2.msra.mxu0 %v470
        %620 = vmatprep.mubr.f32.mxu0 %v421
        %621 = vmatmul.mubr.f32.gmra.mxu0 %v420
        %v622 = vpop.f32.mrf.mxu0
        %v623 = vadd.f32 %v553, %v622
        %v624 = vpop.f32.mrf.mxu0
        %625 = vdwg.mxu0
        %626 = vmatprep.subr.mxu0 0.0
        %627 = vmatpush1.msra.mxu0 %v369
        %628 = vmatprep.subr.mxu0 0.0
        %629 = vmatpush1.msra.mxu0 %v368
        %630 = vmatprep.subr.mxu0 0.0
        %631 = vmatpush1.msra.mxu0 %v367
        %632 = vmatprep.subr.mxu0 0.0
        %633 = vmatpush1.msra.mxu0 %v366
        %634 = vmatprep.subr.mxu0 0.0
        %635 = vmatpush1.msra.mxu0 %v365
        %636 = vmatprep.subr.mxu0 0.0
        %637 = vmatpush1.msra.mxu0 %v364
        %638 = vmatprep.subr.mxu0 0.0
        %639 = vmatpush1.msra.mxu0 %v363
        %640 = vmatprep.subr.mxu0 0.0
        %641 = vmatpush1.msra.mxu0 %v362
        %642 = vmatprep.subr.mxu0 0.0
        %643 = vmatpush1.msra.mxu0 %v361
        %644 = vmatprep.subr.mxu0 0.0
        %645 = vmatpush1.msra.mxu0 %v360
        %646 = vmatprep.subr.mxu0 0.0
        %647 = vmatpush1.msra.mxu0 %v359
        %648 = vmatprep.subr.mxu0 0.0
        %649 = vmatpush1.msra.mxu0 %v358
        %650 = vmatprep.subr.mxu0 0.0
        %651 = vmatpush1.msra.mxu0 %v357
        %652 = vmatprep.subr.mxu0 0.0
        %653 = vmatpush1.msra.mxu0 %v356
        %654 = vmatprep.subr.mxu0 0.0
        %655 = vmatpush1.msra.mxu0 %v355
        %656 = vmatprep.subr.mxu0 0.0
        %657 = vmatpush1.msra.mxu0 %v354
        %658 = vmatprep.subr.mxu0 0.0
        %659 = vmatpush2.msra.mxu0 %v385
        %660 = vmatprep.subr.mxu0 0.0
        %661 = vmatpush2.msra.mxu0 %v384
        %662 = vmatprep.subr.mxu0 0.0
        %663 = vmatpush2.msra.mxu0 %v383
        %664 = vmatprep.subr.mxu0 0.0
        %665 = vmatpush2.msra.mxu0 %v382
        %666 = vmatprep.subr.mxu0 0.0
        %667 = vmatpush2.msra.mxu0 %v381
        %668 = vmatprep.subr.mxu0 0.0
        %669 = vmatpush2.msra.mxu0 %v380
        %670 = vmatprep.subr.mxu0 0.0
        %671 = vmatpush2.msra.mxu0 %v379
        %672 = vmatprep.subr.mxu0 0.0
        %673 = vmatpush2.msra.mxu0 %v378
        %674 = vmatprep.subr.mxu0 0.0
        %675 = vmatpush2.msra.mxu0 %v377
        %676 = vmatprep.subr.mxu0 0.0
        %677 = vmatpush2.msra.mxu0 %v376
        %678 = vmatprep.subr.mxu0 0.0
        %679 = vmatpush2.msra.mxu0 %v375
        %680 = vmatprep.subr.mxu0 0.0
        %681 = vmatpush2.msra.mxu0 %v374
        %682 = vmatprep.subr.mxu0 0.0
        %683 = vmatpush2.msra.mxu0 %v373
        %684 = vmatprep.subr.mxu0 0.0
        %685 = vmatpush2.msra.mxu0 %v372
        %686 = vmatprep.subr.mxu0 0.0
        %687 = vmatpush2.msra.mxu0 %v371
        %688 = vmatprep.subr.mxu0 0.0
        %689 = vmatpush2.msra.mxu0 %v370
        %690 = vmatprep.mubr.f32.mxu0 %v351
        %691 = vmatmul.mubr.f32.gmra.mxu0 %v350
        %v692 = vpop.f32.mrf.mxu0
        %v693 = vadd.f32 %v623, %v692
        %v694 = vpop.f32.mrf.mxu0
        %695 = vdwg.mxu0
        %696 = vmatprep.subr.mxu0 0.0
        %697 = vmatpush1.msra.mxu0 %v401
        %698 = vmatprep.subr.mxu0 0.0
        %699 = vmatpush1.msra.mxu0 %v400
        %700 = vmatprep.subr.mxu0 0.0
        %701 = vmatpush1.msra.mxu0 %v399
        %702 = vmatprep.subr.mxu0 0.0
        %703 = vmatpush1.msra.mxu0 %v398
        %704 = vmatprep.subr.mxu0 0.0
        %705 = vmatpush1.msra.mxu0 %v397
        %706 = vmatprep.subr.mxu0 0.0
        %707 = vmatpush1.msra.mxu0 %v396
        %708 = vmatprep.subr.mxu0 0.0
        %709 = vmatpush1.msra.mxu0 %v395
        %710 = vmatprep.subr.mxu0 0.0
        %711 = vmatpush1.msra.mxu0 %v394
        %712 = vmatprep.subr.mxu0 0.0
        %713 = vmatpush1.msra.mxu0 %v393
        %714 = vmatprep.subr.mxu0 0.0
        %715 = vmatpush1.msra.mxu0 %v392
        %716 = vmatprep.subr.mxu0 0.0
        %717 = vmatpush1.msra.mxu0 %v391
        %718 = vmatprep.subr.mxu0 0.0
        %719 = vmatpush1.msra.mxu0 %v390
        %720 = vmatprep.subr.mxu0 0.0
        %721 = vmatpush1.msra.mxu0 %v389
        %722 = vmatprep.subr.mxu0 0.0
        %723 = vmatpush1.msra.mxu0 %v388
        %724 = vmatprep.subr.mxu0 0.0
        %725 = vmatpush1.msra.mxu0 %v387
        %726 = vmatprep.subr.mxu0 0.0
        %727 = vmatpush1.msra.mxu0 %v386
        %728 = vmatprep.subr.mxu0 0.0
        %729 = vmatpush2.msra.mxu0 %v417
        %730 = vmatprep.subr.mxu0 0.0
        %731 = vmatpush2.msra.mxu0 %v416
        %732 = vmatprep.subr.mxu0 0.0
        %733 = vmatpush2.msra.mxu0 %v415
        %734 = vmatprep.subr.mxu0 0.0
        %735 = vmatpush2.msra.mxu0 %v414
        %736 = vmatprep.subr.mxu0 0.0
        %737 = vmatpush2.msra.mxu0 %v413
        %738 = vmatprep.subr.mxu0 0.0
        %739 = vmatpush2.msra.mxu0 %v412
        %740 = vmatprep.subr.mxu0 0.0
        %741 = vmatpush2.msra.mxu0 %v411
        %742 = vmatprep.subr.mxu0 0.0
        %743 = vmatpush2.msra.mxu0 %v410
        %744 = vmatprep.subr.mxu0 0.0
        %745 = vmatpush2.msra.mxu0 %v409
        %746 = vmatprep.subr.mxu0 0.0
        %747 = vmatpush2.msra.mxu0 %v408
        %748 = vmatprep.subr.mxu0 0.0
        %749 = vmatpush2.msra.mxu0 %v407
        %750 = vmatprep.subr.mxu0 0.0
        %751 = vmatpush2.msra.mxu0 %v406
        %752 = vmatprep.subr.mxu0 0.0
        %753 = vmatpush2.msra.mxu0 %v405
        %754 = vmatprep.subr.mxu0 0.0
        %755 = vmatpush2.msra.mxu0 %v404
        %756 = vmatprep.subr.mxu0 0.0
        %757 = vmatpush2.msra.mxu0 %v403
        %758 = vmatprep.subr.mxu0 0.0
        %759 = vmatpush2.msra.mxu0 %v402
        %760 = vmatprep.mubr.f32.mxu0 %v353
        %761 = vmatmul.mubr.f32.gmra.mxu0 %v352
        %v762 = vpop.f32.mrf.mxu0
        %v763 = vadd.f32 %v693, %v762
        %v764 = vpop.f32.mrf.mxu0
        %765 = vdwg.mxu0
        %v766 = vld [vmem:[%s349] sm:$0x1]
        %v768 = vlaneseq
        %v769 = vshrl.u32 %v768, 7
        %v770 = vsub.s32 0, %v769
        %v771 = vrot.slane %v766, %v770
        %v773 = vadd.f32 %v763, %v771
        %774 = vst [vmem:[%s346] sm:$0xff] %v773
        %s775 = sand.u32 %s178, 1
        %s776 = scalar_lea.sflag [#allocation4], %s775
        %s777 = sand.u32 %s178, 1
        %s778 = smul.addr %s777, 8
        %s779 = scalar_lea.vmem [#allocation10], %s778
        // Predicated region
        $region57: #{tpu_custom_call.1} parent=39 // pred_check
          %p780 = pneg %p188
        $region58: #{tpu_custom_call.1} parent=39 // pred_check_branch
          %782 = sbr.rel (%p780) target = $region60
        $region59: #{tpu_custom_call.1} parent=39 // pred_region
          %s784 = ssub.s32 128, 128
          %785 = vsyncadd %s776, %s784
          %s786 = sadd.s32 %s30, %s31
          %s787 = smul.addr %s786, 128
          %s788 = scalar_lea.hbm %s5, %s787
          %s790 = sshll.u32 %s779, 4
          %s791 = int_to_ptr.vmem [resolvable:$true] %s790
          %793 = dma.vmem_to_hbm [thread:$0]  %s791, 128, %s788, %s776
        $region60: #{tpu_custom_call.1} parent=39 // pred_fallthru
          _
      $region40: #{tpu_custom_call.1} parent=5 // pred_fallthru
        _
      %p794 = scmp.le.s32.totalorder 2, %s21
      // Predicated region
      $region61: #{tpu_custom_call.1} parent=5 // pred_check
        %p795 = pneg %p794
      $region62: #{tpu_custom_call.1} parent=5 // pred_check_branch
        %797 = sbr.rel (%p795) target = $region64
      $region63: #{tpu_custom_call.1} parent=5 // pred_region
        %s798 = ssub.s32 %s21, 2
        // Predicated region
        $region65: #{tpu_custom_call.1} parent=63 // pred_check
          %p799 = pneg %p194
        $region66: #{tpu_custom_call.1} parent=63 // pred_check_branch
          %801 = sbr.rel (%p799) target = $region68
        $region67: #{tpu_custom_call.1} parent=63 // pred_region
          %s802 = sand.u32 %s179, 1
          %s803 = scalar_lea.sflag [#allocation4], %s802
          %s804 = sand.u32 %s179, 1
          %s805 = smul.addr %s804, 8
          %s806 = scalar_lea.vmem [#allocation10], %s805
          %807 = dma.done %s803, 128
        $region68: #{tpu_custom_call.1} parent=63 // pred_fallthru
          _
      $region64: #{tpu_custom_call.1} parent=5 // pred_fallthru
        _
    $region6: #{tpu_custom_call.1} parent=1 // loop_footer
      %s25 = sadd.s32 1, %s21
    $region7: #{tpu_custom_call.1} parent=1 // loop_footer_branch
      %20 = sbr.rel target = $region3
    $region8: #{tpu_custom_call.1} parent=1 // loop_exit
      _
    %808 = vsyncpa [#allocation3], 1
    %s809 = scalar_lea.sflag [#allocation3], 1
    %810 = vsyncpa %s809, 1
    %811 = vsyncpa [#allocation6], 1
    %s812 = scalar_lea.sflag [#allocation6], 1
    %813 = vsyncpa %s812, 1
    %814 = vsyncpa [#allocation9], 1
    %815 = vsyncpa [#allocation4], 1
    %s816 = scalar_lea.sflag [#allocation4], 1
    %817 = vsyncpa %s816, 1

</llo_original>
